<compile_context>
chip_gen: v7x
topology: tpu7x:2x2x1
jax: 0.10.0
libtpu: 0.0.40
codegen_flags: <defaults>
</compile_context>

<pallas_src>
import functools

import jax
import jax.numpy as jnp
from jax.experimental import pallas as pl
from jax.experimental.pallas import tpu as pltpu


_PAD_KEY = jnp.iinfo(jnp.int32).min  # sentinel for padded *input* slots only


def _round_up(a: int, b: int) -> int:
    return ((a + b - 1) // b) * b


# --------------------- Kernel A: hashed key -> embedding row index ------------
def _keymap_kernel(dkey_ref, dval_ref, x_ref, idx_ref, *, num_keys, num_rows):
    # dkey_ref/dval_ref: (K,) int32 in SMEM (scalar prefetch)  -- the dict
    # x_ref:   (TS, 128) int32 -- hashed input keys, sublane + lane dense
    # idx_ref: (TS, 128) int32 -- dict.get(key, 0), clamped to [0, V)
    keys = x_ref[...]

    def body(k, acc):
        dk = dkey_ref[k]                       # scalar SMEM read
        dv = dval_ref[k]
        # dict.get(key, 0): running max over matches (values >= 0; max also
        # degrades gracefully if two truncated keys alias).
        return jnp.maximum(acc, jnp.where(keys == dk, dv, 0))

    acc = jax.lax.fori_loop(0, num_keys, body, jnp.zeros_like(keys))
    idx_ref[...] = jnp.clip(acc, 0, num_rows - 1)


# --------------------- Kernel B: batched manual-DMA row gather ----------------
def _gather_kernel(idx_ref, table_hbm, out_ref, buf_ref, sem_ref, *,
                   rows_per_step, pack, dim):
    # idx_ref:   (Ng,) int32 in SMEM (scalar prefetch) -- mapped row indices
    # table_hbm: (V, D) in HBM (pl.ANY)                -- never resident in VMEM
    # out_ref:   (G/P, P*D) VMEM output block (lane dense last dim)
    # buf_ref:   (G/P, P*D) VMEM scratch -- DMA landing buffer
    # sem_ref:   (1,) DMA semaphore (all copies are the same size)
    G, P, D = rows_per_step, pack, dim
    base = pl.program_id(0) * G

    # Issue all G row DMAs first (kept in flight together), then wait, then a
    # single dense, lane-wide vector store.
    for p in range(P):                                   # static, tiny
        def _issue(r, carry, p=p):
            g = r * P + p
            row = idx_ref[base + g]
            pltpu.make_async_copy(
                table_hbm.at[row],                       # (D,) row in HBM
                buf_ref.at[r, pl.ds(p * D, D)],          # packed slot in VMEM
                sem_ref.at[0],
            ).start()
            return carry
        jax.lax.fori_loop(0, G // P, _issue, 0)

    for p in range(P):
        def _wait(r, carry, p=p):
            pltpu.make_async_copy(
                table_hbm.at[0],
                buf_ref.at[r, pl.ds(p * D, D)],
                sem_ref.at[0],
            ).wait()
            return carry
        jax.lax.fori_loop(0, G // P, _wait, 0)

    out_ref[...] = buf_ref[...]


# ------------------------------- wrapper ---------------------------------------
def dummy_embedding_forward(x, dict_keys, dict_vals, table):
    """x: (B, S) int hashed keys -> (B, S, D) embeddings (same dtype as table)."""
    B, S = x.shape
    N = B * S
    V, D = table.shape
    K = int(dict_keys.shape[0])

    x_flat = x.reshape(N).astype(jnp.int32)
    dkeys = dict_keys.astype(jnp.int32)
    dvals = dict_vals.astype(jnp.int32)

    # ---------------- Kernel A: keymap over (TS, 128) dense key tiles --------
    lanes = 128
    R = _round_up(max(N, 1), lanes) // lanes
    TS = min(256, _round_up(R, 8))           # sublanes per tile (multiple of 8)
    R = _round_up(R, TS)
    Npad = R * lanes

    x_pad = jnp.full((Npad,), _PAD_KEY, jnp.int32).at[:N].set(x_flat)
    x2d = x_pad.reshape(R, lanes)

    idx2d = pl.pallas_call(
        functools.partial(_keymap_kernel, num_keys=K, num_rows=V),
        out_shape=jax.ShapeDtypeStruct((R, lanes), jnp.int32),
        grid_spec=pltpu.PrefetchScalarGridSpec(
            num_scalar_prefetch=2,
            grid=(R // TS,),
            in_specs=[pl.BlockSpec((TS, lanes), lambda i, dk, dv: (i, 0))],
            out_specs=pl.BlockSpec((TS, lanes), lambda i, dk, dv: (i, 0)),
        ),
        compiler_params=pltpu.CompilerParams(
            dimension_semantics=("parallel",),
        ),
    )(dkeys, dvals, x2d)
    idx_flat = idx2d.reshape(Npad)            # padded tail is clamped & sliced off

    # ---------------- Kernel B: batched gather, packed lane-dense output -----
    P = lanes // D if lanes % D == 0 else 1   # gathered rows per 128-lane row
    G = 8 * P                                 # minimal (8,128)-aligned batch
    max_g = min(256, _round_up(max(N, 1), 8 * P))
    while G * 2 <= max_g:                     # amortize per-step overhead
        G *= 2
    Ng = _round_up(max(N, 1), G)
    if Ng <= Npad:
        idx_g = jax.lax.slice(idx_flat, (0,), (Ng,))
    else:
        idx_g = jnp.pad(idx_flat, (0, Ng - Npad))
    steps = Ng // G

    out_packed = pl.pallas_call(
        functools.partial(_gather_kernel, rows_per_step=G, pack=P, dim=D),
        out_shape=jax.ShapeDtypeStruct((Ng // P, P * D), table.dtype),
        grid_spec=pltpu.PrefetchScalarGridSpec(
            num_scalar_prefetch=1,
            grid=(steps,),
            in_specs=[pl.BlockSpec(memory_space=pl.ANY)],      # table stays in HBM
            out_specs=pl.BlockSpec((G // P, P * D), lambda i, idx: (i, 0)),
            scratch_shapes=[
                pltpu.VMEM((G // P, P * D), table.dtype),
                pltpu.SemaphoreType.DMA((1,)),
            ],
        ),
        compiler_params=pltpu.CompilerParams(
            dimension_semantics=("parallel",),
        ),
    )(idx_g, table)

    # (Ng/P, P*D) row-major has exactly the same bytes as (Ng, D): free reshape.
    out = out_packed.reshape(Ng, D)[:N]
    return out.reshape(B, S, D)


if __name__ == "__main__":
    key = jax.random.PRNGKey(0)
    k_table, k_input = jax.random.split(key)

    # Embedding "data" (as passed to DummyEmbedding.__init__): V rows, D dim.
    V, D = 10, 32
    table = jax.random.normal(k_table, (V, D), dtype=jnp.float32)
    table = table.at[0].set(0.0)   # damo convention: row 0 is the default row

    # Key map dict: hashed keys -> embedding row indices 1..K.
    hashed_keys = jnp.array([1001, 2002, 3003, 4004, 5005, 6006, 7007],
                            dtype=jnp.int32)
    row_vals = jnp.arange(1, hashed_keys.shape[0] + 1, dtype=jnp.int32)

    # Input: (B, S) hashed keys, some present in the dict, some absent (-> row 0).
    B, S = 2, 8
    candidate_pool = jnp.concatenate(
        [hashed_keys, jnp.array([1234, 9999, 42], dtype=jnp.int32)])
    x = jax.random.choice(k_input, candidate_pool, shape=(B, S))

    out = dummy_embedding_forward(x, hashed_keys, row_vals, table)
    out = jax.block_until_ready(out)

    # Pure-JAX reference mirroring dict.get(key, 0) (dict keys are unique).
    ref_idx = jnp.zeros((B, S), jnp.int32)
    for hk, rv in zip(hashed_keys.tolist(), row_vals.tolist()):
        ref_idx = jnp.where(x == hk, jnp.int32(rv), ref_idx)
    ref = table[ref_idx]

    assert out.shape == (B, S, D)
    assert out.dtype == jnp.float32
    assert jnp.allclose(out, ref, atol=1e-6), "mismatch vs reference"
    print("KERNEL_OK")
</pallas_src>

<mosaic_0001>
module attributes {stable_mosaic.version = 11 : i64} {
  func.func @_keymap_kernel(%arg0: i32, %arg1: memref<7xi32, #tpu.memory_space<smem>>, %arg2: memref<7xi32, #tpu.memory_space<smem>>, %arg3: memref<8x128xi32, #tpu.memory_space<vmem>>, %arg4: memref<8x128xi32, #tpu.memory_space<vmem>>) attributes {dimension_semantics = [#tpu.dimension_semantics<parallel>], iteration_bounds = array<i64: 1>, scalar_prefetch = 2 : i64, scratch_operands = 0 : i64, tpu.core_type = #tpu.core_type<tc>, window_params = [{transform_indices = @transform_0, window_bounds = array<i64: 8, 128>}, {transform_indices = @transform_1, window_bounds = array<i64: 8, 128>}]} {
    %c0 = arith.constant 0 : index
    %c0_0 = arith.constant 0 : index
    %0 = vector.load %arg3[%c0, %c0_0] : memref<8x128xi32, #tpu.memory_space<vmem>>, vector<8x128xi32>
    %c0_i32 = arith.constant 0 : i32
    %1 = vector.broadcast %c0_i32 : i32 to vector<8x128xi32>
    %c0_i32_1 = arith.constant 0 : i32
    %c7_i32 = arith.constant 7 : i32
    %2 = arith.addi %c0_i32_1, %c7_i32 : i32
    %c1_i32 = arith.constant 1 : i32
    %3 = scf.for %arg5 = %c0_i32_1 to %2 step %c1_i32 iter_args(%arg6 = %1) -> (vector<8x128xi32>)  : i32 {
      %9 = arith.index_cast %arg5 : i32 to index
      %10 = memref.load %arg1[%9] : memref<7xi32, #tpu.memory_space<smem>>
      %11 = arith.index_cast %arg5 : i32 to index
      %12 = memref.load %arg2[%11] : memref<7xi32, #tpu.memory_space<smem>>
      %13 = vector.broadcast %10 : i32 to vector<8x128xi32>
      %14 = arith.cmpi eq, %0, %13 : vector<8x128xi32>
      %c0_i32_6 = arith.constant 0 : i32
      %15 = vector.broadcast %12 : i32 to vector<8x128xi32>
      %16 = vector.broadcast %c0_i32_6 : i32 to vector<8x128xi32>
      %17 = arith.select %14, %15, %16 : vector<8x128xi1>, vector<8x128xi32>
      %18 = arith.maxsi %arg6, %17 : vector<8x128xi32>
      scf.yield %18 : vector<8x128xi32>
    }
    %c7_i32_2 = arith.constant 7 : i32
    %c0_i32_3 = arith.constant 0 : i32
    %c9_i32 = arith.constant 9 : i32
    %4 = vector.broadcast %c0_i32_3 : i32 to vector<8x128xi32>
    %5 = arith.maxsi %4, %3 : vector<8x128xi32>
    %6 = vector.broadcast %c9_i32 : i32 to vector<8x128xi32>
    %7 = arith.minsi %6, %5 : vector<8x128xi32>
    %c0_4 = arith.constant 0 : index
    %c0_5 = arith.constant 0 : index
    %8 = vector.load %arg4[%c0_4, %c0_5] : memref<8x128xi32, #tpu.memory_space<vmem>>, vector<8x128xi32>
    tpu.vector_store %arg4[%c0_4, %c0_5], %7 {strides = array<i32>} : memref<8x128xi32, #tpu.memory_space<vmem>>, vector<8x128xi32>,
    return
  }
  func.func @transform_0(%arg0: i32, %arg1: memref<7xi32, #tpu.memory_space<smem>>, %arg2: memref<7xi32, #tpu.memory_space<smem>>) -> (i32, i32) {
    %c0_i32 = arith.constant 0 : i32
    %c0_i32_0 = arith.constant 0 : i32
    return %arg0, %c0_i32 : i32, i32
  }
  func.func @transform_1(%arg0: i32, %arg1: memref<7xi32, #tpu.memory_space<smem>>, %arg2: memref<7xi32, #tpu.memory_space<smem>>) -> (i32, i32) {
    %c0_i32 = arith.constant 0 : i32
    %c0_i32_0 = arith.constant 0 : i32
    return %arg0, %c0_i32 : i32, i32
  }
}

</mosaic_0001>

<llo_original>
// kernel: tpu_custom_call.1
$region0: #{tpu_custom_call.1}
  #allocation0 [shape = 'u32[]', space=smem, size = 0x4, offset = 0x4, fixed_abs, tag = 'smem constant byte address 0x4 - core index']
  #allocation1 [shape = 'u32[144,128]{1,0:T(1,128)}', space=vmem, size = 0x12000, scoped, tag = 'internal scratch']
  #allocation2 [shape = 's32[1]{0}', space=sflag, size = 0x4, scoped, tag = 'scoped memory for tpu_custom_call.1']
  #allocation3 [shape = 'u8[512]{0}', space=smem, size = 0x200, scoped, tag = 'prefetched SMEM operand 0']
  #allocation4 [shape = 'u8[512]{0}', space=smem, size = 0x200, scoped, tag = 'prefetched SMEM operand 1']
  %s0 = inlined_call_operand.hbm [shape: s32[7], index: 0, kind: input, shape index: {}]
  %s1 = inlined_call_operand.vmem [shape: s32[7], index: 1, kind: input, shape index: {}]
  %s2 = inlined_call_operand.hbm [shape: s32[8,128], index: 2, kind: input, shape index: {}]
  %s3 = inlined_call_operand.hbm [shape: s32[8,128], index: 3, kind: output, shape index: {}]
  %s4 = sld [smem:[#allocation0]]
  $region25: #{tpu_custom_call.1} parent=0
    _
  %s6 = ssub.s32 1, %s4
  %s7 = scalar_select 0, %s6, %s4
  %9 = dma.hbm_to_smem %s0, 16, [#allocation3], [#allocation2]
  %s10 = sshll.u32 %s1, 4
  %s11 = int_to_ptr.vmem [resolvable:$true] %s10
  %13 = dma.vmem_to_smem %s11, 16, [#allocation4], [#allocation2]
  %14 = dma.done [#allocation2], 32
  %15 = sfence
  $region1: #{tpu_custom_call.1} parent=0
    #allocation5 [shape = 'u8[4096]{0}', space=vmem, size = 0x1000, scoped, tag = 'input window, operand 2, single buffered']
    #allocation6 [shape = 's32[1]{0}', space=sflag, size = 0x4, scoped, tag = 'scoped memory for tpu_custom_call.1']
    #allocation7 [shape = 's32[1]{0}', space=sflag, size = 0x4, scoped, tag = 'scoped memory for tpu_custom_call.1']
    #allocation8 [shape = 'u8[4096]{0}', space=vmem, size = 0x1000, scoped, tag = 'output window, operand 0, single buffered']
    %16 = vsyncpa [#allocation6], 0
    %17 = vsyncpa [#allocation7], 0
    // Predicated region
    $region2: #{tpu_custom_call.1} parent=1 // pred_check
      _
    $region3: #{tpu_custom_call.1} parent=1 // pred_check_branch
      %19 = sbr.rel (0) target = $region5
    $region4: #{tpu_custom_call.1} parent=1 // pred_region
      %s21 = ssub.s32 128, 128
      %22 = vsyncadd [#allocation6], %s21
      %s24 = sshll.u32 [#allocation5], 4
      %s25 = int_to_ptr.vmem [resolvable:$true] %s24
      %27 = dma.hbm_to_vmem [thread:$0]  %s2, 128, %s25, [#allocation6]
    $region5: #{tpu_custom_call.1} parent=1 // pred_fallthru
      _
    // Predicated region
    $region6: #{tpu_custom_call.1} parent=1 // pred_check
      _
    $region7: #{tpu_custom_call.1} parent=1 // pred_check_branch
      %29 = sbr.rel (0) target = $region9
    $region8: #{tpu_custom_call.1} parent=1 // pred_region
      %30 = dma.done [#allocation6], 128
    $region9: #{tpu_custom_call.1} parent=1 // pred_fallthru
      _
    %v31 = vld [vmem:[#allocation5] sm:$0xff]
    loop: start=0, step=1, limit=7
    $region10: #{tpu_custom_call.1} parent=1 // loop_pre_header
      _
    $region11: #{tpu_custom_call.1} parent=1 // loop_header
      %s33 = sphi 0, %s37
      %p34 = scmp.ge.s32.totalorder %s33, 7
      %v38 = vphi 0, %v46
    $region12: #{tpu_custom_call.1} parent=1 // loop_header_branch
      %36 = sbr.rel (%p34) target = $region16
    $region13: #{tpu_custom_call.1} parent=1 // loop_body
      %s39 = sld [smem:[#allocation3 + %s33]]
      %s40 = sld [smem:[#allocation4 + %s33]]
      %v41 = vstv %s39
      %vm42 = vcmp.eq.s32.totalorder %v31, %v41
      %v43 = vstv %s40
      %v44 = vsel %vm42, %v43, 0
      %vm45 = vcmp.gt.s32.totalorder %v38, %v44
      %v46 = vsel %vm45, %v38, %v44
    $region14: #{tpu_custom_call.1} parent=1 // loop_footer
      %s37 = sadd.s32 1, %s33
    $region15: #{tpu_custom_call.1} parent=1 // loop_footer_branch
      %32 = sbr.rel target = $region11
    $region16: #{tpu_custom_call.1} parent=1 // loop_exit
      _
    %vm47 = vcmp.gt.s32.totalorder %v38, 0
    %v48 = vsel %vm47, %v38, 0
    %vm49 = vcmp.lt.s32.totalorder %v48, 9
    %v50 = vsel %vm49, %v48, 9
    %51 = vst [vmem:[#allocation8] sm:$0xff] %v50
    // Predicated region
    $region17: #{tpu_custom_call.1} parent=1 // pred_check
      _
    $region18: #{tpu_custom_call.1} parent=1 // pred_check_branch
      %53 = sbr.rel (0) target = $region20
    $region19: #{tpu_custom_call.1} parent=1 // pred_region
      %s55 = ssub.s32 128, 128
      %56 = vsyncadd [#allocation7], %s55
      %s58 = sshll.u32 [#allocation8], 4
      %s59 = int_to_ptr.vmem [resolvable:$true] %s58
      %61 = dma.vmem_to_hbm [thread:$0]  %s59, 128, %s3, [#allocation7]
    $region20: #{tpu_custom_call.1} parent=1 // pred_fallthru
      _
    // Predicated region
    $region21: #{tpu_custom_call.1} parent=1 // pred_check
      _
    $region22: #{tpu_custom_call.1} parent=1 // pred_check_branch
      %63 = sbr.rel (0) target = $region24
    $region23: #{tpu_custom_call.1} parent=1 // pred_region
      %64 = dma.done [#allocation7], 128
    $region24: #{tpu_custom_call.1} parent=1 // pred_fallthru
      _
    %65 = vsyncpa [#allocation6], 1
    %66 = vsyncpa [#allocation7], 1

</llo_original>
